<compile_context>
chip_gen: v5e
topology: v5e:2x2
jax: 0.10.0
libtpu: 0.0.40
codegen_flags: <defaults>
</compile_context>

<pallas_src>
import jax
import jax.numpy as jnp
from jax.experimental import pallas as pl
from jax.experimental.pallas import tpu as pltpu

PAD = 128  # lane padding around the flattened image; multiple of 128 and >= W+1


def _round_up(v, m):
    return (v + m - 1) // m * m


def make_fused_kernel(W, HW, Cout, CinP, CoutP):
    """Kernel: one batch image per grid step, both conv layers fused."""

    def kernel(x_ref, masks_ref, w1_ref, b1_ref, w2_ref, b2_ref, o_ref,
               xpad_ref, midpad_ref):
        # x_ref:      (1, CinP, HW)         flattened, channel-padded image
        # masks_ref:  (2, HW)               [0]="w-1 tap valid", [1]="w+1 tap valid"
        # w1_ref:     (CoutP, 9*CinP)       im2col conv1 weights (K = tap*CinP + cin)
        # b1_ref:     (CoutP, 1)            conv1 bias - 3.2 (0 in padded rows)
        # w2_ref:     (CoutP, 9*CoutP)      im2col conv2 weights
        # b2_ref:     (CoutP, 1)            conv2 bias - 8.96 (0 in padded rows)
        # o_ref:      (1, Cout, HW)
        # xpad_ref:   (CinP,  2*PAD + HW)   VMEM plane; zero borders == SAME padding
        # midpad_ref: (CoutP, 2*PAD + HW)   VMEM plane for the ELU intermediate

        # Zero only the two 128-lane borders (aligned stores); centers are
        # overwritten below.  Done every step so it is safe with a "parallel"
        # grid on multi-core chips.
        xpad_ref[:, 0:PAD] = jnp.zeros((CinP, PAD), jnp.float32)
        xpad_ref[:, PAD + HW:2 * PAD + HW] = jnp.zeros((CinP, PAD), jnp.float32)
        midpad_ref[:, 0:PAD] = jnp.zeros((CoutP, PAD), jnp.float32)
        midpad_ref[:, PAD + HW:2 * PAD + HW] = jnp.zeros((CoutP, PAD), jnp.float32)
        xpad_ref[:, PAD:PAD + HW] = x_ref[0]

        mask_l = masks_ref[0:1, :]   # (1, HW): zero where the w-1 tap wraps a row
        mask_r = masks_ref[1:2, :]   # (1, HW): zero where the w+1 tap wraps a row

        def conv3x3(src_ref, w_ref, b_ref):
            # Build the (9*Cp, HW) im2col matrix (tap-major, channel-minor) and
            # do a single MXU dot.  Wrap masks are applied while building rows.
            windows = []
            for ky in range(3):
                for kx in range(3):
                    start = PAD + (ky - 1) * W + (kx - 1)
                    win = src_ref[:, start:start + HW]          # (Cp, HW)
                    if kx == 0:
                        win = win * mask_l
                    elif kx == 2:
                        win = win * mask_r
                    windows.append(win)
            col = jnp.concatenate(windows, axis=0)              # (9*Cp, HW)
            acc = jnp.dot(w_ref[...], col,
                          preferred_element_type=jnp.float32)   # (CoutP, HW)
            return acc + b_ref[...]    # effective bias (subtract-const folded in)

        # ---- conv1 + (x - 3.2) + ELU ----
        a1 = conv3x3(xpad_ref, w1_ref, b1_ref)
        a1 = jnp.where(a1 > 0, a1, jnp.exp(jnp.minimum(a1, 0.0)) - 1.0)

        # ---- conv2 + (x - 8.96) + ReLU ----
        midpad_ref[:, PAD:PAD + HW] = a1
        a2 = conv3x3(midpad_ref, w2_ref, b2_ref)
        o_ref[0] = jnp.maximum(a2[:Cout, :], 0.0)

    return kernel


@jax.jit
def model_forward(x_nchw, params):
    """Model.forward: NCHW float32 in -> NCHW float32 out (single fused kernel)."""
    N, Cin, H, W = x_nchw.shape
    HW = H * W
    Cout = params["b1"].shape[0]
    CinP = _round_up(Cin, 8)     # 3  -> 8
    CoutP = _round_up(Cout, 8)   # 10 -> 16
    assert HW % 128 == 0 and PAD >= W + 1

    # Flatten spatial onto lanes, zero-pad channels onto full sublane tiles.
    x_p = jnp.pad(x_nchw.reshape(N, Cin, HW).astype(jnp.float32),
                  ((0, 0), (0, CinP - Cin), (0, 0)))

    def prep_w(w, cin, cin_p):
        # OIHW -> (Cout, tap, cin) with tap = ky*3 + kx, zero-pad both channel
        # dims, flatten to the (CoutP, 9*cin_p) im2col weight matrix.
        wt = jnp.transpose(w.astype(jnp.float32), (0, 2, 3, 1)).reshape(Cout, 9, cin)
        wt = jnp.pad(wt, ((0, CoutP - Cout), (0, 0), (0, cin_p - cin)))
        return wt.reshape(CoutP, 9 * cin_p)

    w1 = prep_w(params["w1"], Cin, CinP)        # (CoutP, 9*CinP)
    w2 = prep_w(params["w2"], Cout, CoutP)      # (CoutP, 9*CoutP)
    # Fold the subtracted constants into the biases (padded rows stay 0).
    b1 = jnp.pad(params["b1"].astype(jnp.float32) - 3.2,
                 (0, CoutP - Cout)).reshape(CoutP, 1)
    b2 = jnp.pad(params["b2"].astype(jnp.float32) - 8.96,
                 (0, CoutP - Cout)).reshape(CoutP, 1)

    # Lane masks for taps that wrap across image rows in the flat layout:
    # kx == 0 reads column w-1, kx == 2 reads column w+1.
    col = jnp.arange(HW, dtype=jnp.int32) % W
    masks = jnp.stack([(col >= 1).astype(jnp.float32),
                       (col <= W - 2).astype(jnp.float32)], axis=0)   # (2, HW)

    out_flat = pl.pallas_call(
        make_fused_kernel(W, HW, Cout, CinP, CoutP),
        out_shape=jax.ShapeDtypeStruct((N, Cout, HW), jnp.float32),
        grid=(N,),
        in_specs=[
            pl.BlockSpec((1, CinP, HW), lambda n: (n, 0, 0)),
            pl.BlockSpec((2, HW), lambda n: (0, 0)),
            pl.BlockSpec((CoutP, 9 * CinP), lambda n: (0, 0)),
            pl.BlockSpec((CoutP, 1), lambda n: (0, 0)),
            pl.BlockSpec((CoutP, 9 * CoutP), lambda n: (0, 0)),
            pl.BlockSpec((CoutP, 1), lambda n: (0, 0)),
        ],
        out_specs=pl.BlockSpec((1, Cout, HW), lambda n: (n, 0, 0)),
        scratch_shapes=[
            pltpu.VMEM((CinP, HW + 2 * PAD), jnp.float32),
            pltpu.VMEM((CoutP, HW + 2 * PAD), jnp.float32),
        ],
        compiler_params=pltpu.CompilerParams(
            dimension_semantics=("parallel",)),   # batch -> both TCs on v7x
    )(x_p, masks, w1, b1, w2, b2)

    return out_flat.reshape(N, Cout, H, W)


# ---------------------------------------------------------------------------
# Pure-JAX reference (for correctness check)
# ---------------------------------------------------------------------------
def _ref_conv(x, w, b):
    y = jax.lax.conv_general_dilated(
        x, w, window_strides=(1, 1), padding="SAME",
        dimension_numbers=("NCHW", "OIHW", "NCHW"),
        precision=jax.lax.Precision.HIGHEST)
    return y + b.reshape(1, -1, 1, 1)


def ref_forward(x_nchw, params):
    v1 = _ref_conv(x_nchw, params["w1"], params["b1"])
    v3 = jax.nn.elu(v1 - 3.2)
    v4 = _ref_conv(v3, params["w2"], params["b2"])
    return jax.nn.relu(v4 - 8.96)


if __name__ == "__main__":
    key = jax.random.PRNGKey(0)
    k_x, k_w1, k_b1, k_w2, k_b2 = jax.random.split(key, 5)

    # Small shapes consistent with the module (conv1 requires 3 input channels).
    N, C, H, W = 2, 3, 16, 16
    x = jax.random.normal(k_x, (N, C, H, W), dtype=jnp.float32)

    # PyTorch-layout (OIHW) parameters. Scales chosen so both ELU branches and
    # the final ReLU threshold are actually exercised.
    params = {
        "w1": jax.random.normal(k_w1, (10, 3, 3, 3), dtype=jnp.float32) * 0.5,
        "b1": jax.random.normal(k_b1, (10,), dtype=jnp.float32) * 0.5,
        "w2": jax.random.normal(k_w2, (10, 10, 3, 3), dtype=jnp.float32) * 0.5,
        "b2": jax.random.normal(k_b2, (10,), dtype=jnp.float32) * 0.5,
    }

    out = jax.block_until_ready(model_forward(x, params))
    ref = jax.block_until_ready(ref_forward(x, params))

    assert out.shape == (N, 10, H, W), out.shape
    # Structural-correctness check; tolerance allows for MXU matmul precision
    # differing from the HIGHEST-precision XLA conv reference.
    err = float(jnp.max(jnp.abs(out - ref)))
    scale = float(jnp.max(jnp.abs(ref)))
    assert err <= 1e-2 * (1.0 + scale), f"max abs err {err} (ref scale {scale})"
    print("KERNEL_OK")
</pallas_src>

<mosaic_0001>
module attributes {stable_mosaic.version = 11 : i64} {
  func.func @kernel(%arg0: i32, %arg1: memref<1x8x256xf32, #tpu.memory_space<vmem>>, %arg2: memref<2x256xf32, #tpu.memory_space<vmem>>, %arg3: memref<16x72xf32, #tpu.memory_space<vmem>>, %arg4: memref<16x1xf32, #tpu.memory_space<vmem>>, %arg5: memref<16x144xf32, #tpu.memory_space<vmem>>, %arg6: memref<16x1xf32, #tpu.memory_space<vmem>>, %arg7: memref<1x10x256xf32, #tpu.memory_space<vmem>>, %arg8: memref<8x512xf32, #tpu.memory_space<vmem>>, %arg9: memref<16x512xf32, #tpu.memory_space<vmem>>) attributes {dimension_semantics = [#tpu.dimension_semantics<parallel>], iteration_bounds = array<i64: 2>, scalar_prefetch = 0 : i64, scratch_operands = 2 : i64, tpu.core_type = #tpu.core_type<tc>, window_params = [{transform_indices = @transform_0, window_bounds = array<i64: 1, 8, 256>}, {pipeline_mode = #tpu.pipeline_mode<synchronous>, transform_indices = @transform_1, window_bounds = array<i64: 2, 256>}, {pipeline_mode = #tpu.pipeline_mode<synchronous>, transform_indices = @transform_2, window_bounds = array<i64: 16, 72>}, {pipeline_mode = #tpu.pipeline_mode<synchronous>, transform_indices = @transform_3, window_bounds = array<i64: 16, 1>}, {pipeline_mode = #tpu.pipeline_mode<synchronous>, transform_indices = @transform_4, window_bounds = array<i64: 16, 144>}, {pipeline_mode = #tpu.pipeline_mode<synchronous>, transform_indices = @transform_5, window_bounds = array<i64: 16, 1>}, {transform_indices = @transform_6, window_bounds = array<i64: 1, 10, 256>}]} {
    %cst = arith.constant 0.000000e+00 : f32
    %0 = vector.broadcast %cst : f32 to vector<8x128xf32>
    %c0 = arith.constant 0 : index
    %c0_0 = arith.constant 0 : index
    %1 = vector.load %arg8[%c0, %c0_0] : memref<8x512xf32, #tpu.memory_space<vmem>>, vector<8x128xf32>
    tpu.vector_store %arg8[%c0, %c0_0], %0 {strides = array<i32>} : memref<8x512xf32, #tpu.memory_space<vmem>>, vector<8x128xf32>,
    %cst_1 = arith.constant 0.000000e+00 : f32
    %2 = vector.broadcast %cst_1 : f32 to vector<8x128xf32>
    %c0_2 = arith.constant 0 : index
    %c384 = arith.constant 384 : index
    %3 = vector.load %arg8[%c0_2, %c384] : memref<8x512xf32, #tpu.memory_space<vmem>>, vector<8x128xf32>
    tpu.vector_store %arg8[%c0_2, %c384], %2 {strides = array<i32>} : memref<8x512xf32, #tpu.memory_space<vmem>>, vector<8x128xf32>,
    %cst_3 = arith.constant 0.000000e+00 : f32
    %4 = vector.broadcast %cst_3 : f32 to vector<16x128xf32>
    %c0_4 = arith.constant 0 : index
    %c0_5 = arith.constant 0 : index
    %5 = vector.load %arg9[%c0_4, %c0_5] : memref<16x512xf32, #tpu.memory_space<vmem>>, vector<16x128xf32>
    tpu.vector_store %arg9[%c0_4, %c0_5], %4 {strides = array<i32>} : memref<16x512xf32, #tpu.memory_space<vmem>>, vector<16x128xf32>,
    %cst_6 = arith.constant 0.000000e+00 : f32
    %6 = vector.broadcast %cst_6 : f32 to vector<16x128xf32>
    %c0_7 = arith.constant 0 : index
    %c384_8 = arith.constant 384 : index
    %7 = vector.load %arg9[%c0_7, %c384_8] : memref<16x512xf32, #tpu.memory_space<vmem>>, vector<16x128xf32>
    tpu.vector_store %arg9[%c0_7, %c384_8], %6 {strides = array<i32>} : memref<16x512xf32, #tpu.memory_space<vmem>>, vector<16x128xf32>,
    %c0_9 = arith.constant 0 : index
    %c0_10 = arith.constant 0 : index
    %c0_11 = arith.constant 0 : index
    %8 = vector.load %arg1[%c0_9, %c0_10, %c0_11] : memref<1x8x256xf32, #tpu.memory_space<vmem>>, vector<1x8x256xf32>
    %9 = vector.shape_cast %8 : vector<1x8x256xf32> to vector<8x256xf32>
    %c0_12 = arith.constant 0 : index
    %c128 = arith.constant 128 : index
    %10 = vector.load %arg8[%c0_12, %c128] : memref<8x512xf32, #tpu.memory_space<vmem>>, vector<8x256xf32>
    tpu.vector_store %arg8[%c0_12, %c128], %9 {strides = array<i32>} : memref<8x512xf32, #tpu.memory_space<vmem>>, vector<8x256xf32>,
    %c0_13 = arith.constant 0 : index
    %c0_14 = arith.constant 0 : index
    %11 = vector.load %arg2[%c0_13, %c0_14] : memref<2x256xf32, #tpu.memory_space<vmem>>, vector<1x256xf32>
    %c1 = arith.constant 1 : index
    %c0_15 = arith.constant 0 : index
    %12 = vector.load %arg2[%c1, %c0_15] : memref<2x256xf32, #tpu.memory_space<vmem>>, vector<1x256xf32>
    %c0_16 = arith.constant 0 : index
    %c111 = arith.constant 111 : index
    %13 = vector.load %arg8[%c0_16, %c111] : memref<8x512xf32, #tpu.memory_space<vmem>>, vector<8x256xf32>
    %14 = vector.broadcast %11 : vector<1x256xf32> to vector<8x256xf32>
    %15 = arith.mulf %13, %14 : vector<8x256xf32>
    %c0_17 = arith.constant 0 : index
    %c112 = arith.constant 112 : index
    %16 = vector.load %arg8[%c0_17, %c112] : memref<8x512xf32, #tpu.memory_space<vmem>>, vector<8x256xf32>
    %c0_18 = arith.constant 0 : index
    %c113 = arith.constant 113 : index
    %17 = vector.load %arg8[%c0_18, %c113] : memref<8x512xf32, #tpu.memory_space<vmem>>, vector<8x256xf32>
    %18 = vector.broadcast %12 : vector<1x256xf32> to vector<8x256xf32>
    %19 = arith.mulf %17, %18 : vector<8x256xf32>
    %c0_19 = arith.constant 0 : index
    %c127 = arith.constant 127 : index
    %20 = vector.load %arg8[%c0_19, %c127] : memref<8x512xf32, #tpu.memory_space<vmem>>, vector<8x256xf32>
    %21 = vector.broadcast %11 : vector<1x256xf32> to vector<8x256xf32>
    %22 = arith.mulf %20, %21 : vector<8x256xf32>
    %c0_20 = arith.constant 0 : index
    %c128_21 = arith.constant 128 : index
    %23 = vector.load %arg8[%c0_20, %c128_21] : memref<8x512xf32, #tpu.memory_space<vmem>>, vector<8x256xf32>
    %c0_22 = arith.constant 0 : index
    %c129 = arith.constant 129 : index
    %24 = vector.load %arg8[%c0_22, %c129] : memref<8x512xf32, #tpu.memory_space<vmem>>, vector<8x256xf32>
    %25 = vector.broadcast %12 : vector<1x256xf32> to vector<8x256xf32>
    %26 = arith.mulf %24, %25 : vector<8x256xf32>
    %c0_23 = arith.constant 0 : index
    %c143 = arith.constant 143 : index
    %27 = vector.load %arg8[%c0_23, %c143] : memref<8x512xf32, #tpu.memory_space<vmem>>, vector<8x256xf32>
    %28 = vector.broadcast %11 : vector<1x256xf32> to vector<8x256xf32>
    %29 = arith.mulf %27, %28 : vector<8x256xf32>
    %c0_24 = arith.constant 0 : index
    %c144 = arith.constant 144 : index
    %30 = vector.load %arg8[%c0_24, %c144] : memref<8x512xf32, #tpu.memory_space<vmem>>, vector<8x256xf32>
    %c0_25 = arith.constant 0 : index
    %c145 = arith.constant 145 : index
    %31 = vector.load %arg8[%c0_25, %c145] : memref<8x512xf32, #tpu.memory_space<vmem>>, vector<8x256xf32>
    %32 = vector.broadcast %12 : vector<1x256xf32> to vector<8x256xf32>
    %33 = arith.mulf %31, %32 : vector<8x256xf32>
    %34 = tpu.concatenate %15, %16, %19, %22, %23, %26, %29, %30, %33 in 0 : vector<8x256xf32>, vector<8x256xf32>, vector<8x256xf32>, vector<8x256xf32>, vector<8x256xf32>, vector<8x256xf32>, vector<8x256xf32>, vector<8x256xf32>, vector<8x256xf32> -> vector<72x256xf32>
    %c0_26 = arith.constant 0 : index
    %c0_27 = arith.constant 0 : index
    %35 = vector.load %arg3[%c0_26, %c0_27] : memref<16x72xf32, #tpu.memory_space<vmem>>, vector<16x72xf32>
    %cst_28 = arith.constant dense<0.000000e+00> : vector<16x256xf32>
    %36 = tpu.matmul %35, %34, %cst_28 {dimension_numbers = #tpu.dot_dimension_numbers<[1], [0], [0], [1], [0, 0, 1, 1], [], []>} : vector<16x72xf32>, vector<72x256xf32>, vector<16x256xf32> -> vector<16x256xf32>
    %c0_29 = arith.constant 0 : index
    %c0_30 = arith.constant 0 : index
    %37 = vector.load %arg4[%c0_29, %c0_30] : memref<16x1xf32, #tpu.memory_space<vmem>>, vector<16x1xf32>
    %38 = vector.broadcast %37 : vector<16x1xf32> to vector<16x256xf32>
    %39 = arith.addf %36, %38 : vector<16x256xf32>
    %cst_31 = arith.constant 0.000000e+00 : f32
    %40 = vector.broadcast %cst_31 : f32 to vector<16x256xf32>
    %41 = arith.cmpf ogt, %39, %40 : vector<16x256xf32>
    %cst_32 = arith.constant 0.000000e+00 : f32
    %42 = vector.broadcast %cst_32 : f32 to vector<16x256xf32>
    %43 = arith.minimumf %39, %42 : vector<16x256xf32>
    %44 = math.exp %43 : vector<16x256xf32>
    %cst_33 = arith.constant 1.000000e+00 : f32
    %45 = vector.broadcast %cst_33 : f32 to vector<16x256xf32>
    %46 = arith.subf %44, %45 : vector<16x256xf32>
    %47 = arith.select %41, %39, %46 : vector<16x256xi1>, vector<16x256xf32>
    %c0_34 = arith.constant 0 : index
    %c128_35 = arith.constant 128 : index
    %48 = vector.load %arg9[%c0_34, %c128_35] : memref<16x512xf32, #tpu.memory_space<vmem>>, vector<16x256xf32>
    tpu.vector_store %arg9[%c0_34, %c128_35], %47 {strides = array<i32>} : memref<16x512xf32, #tpu.memory_space<vmem>>, vector<16x256xf32>,
    %c0_36 = arith.constant 0 : index
    %c111_37 = arith.constant 111 : index
    %49 = vector.load %arg9[%c0_36, %c111_37] : memref<16x512xf32, #tpu.memory_space<vmem>>, vector<16x256xf32>
    %50 = vector.broadcast %11 : vector<1x256xf32> to vector<16x256xf32>
    %51 = arith.mulf %49, %50 : vector<16x256xf32>
    %c0_38 = arith.constant 0 : index
    %c112_39 = arith.constant 112 : index
    %52 = vector.load %arg9[%c0_38, %c112_39] : memref<16x512xf32, #tpu.memory_space<vmem>>, vector<16x256xf32>
    %c0_40 = arith.constant 0 : index
    %c113_41 = arith.constant 113 : index
    %53 = vector.load %arg9[%c0_40, %c113_41] : memref<16x512xf32, #tpu.memory_space<vmem>>, vector<16x256xf32>
    %54 = vector.broadcast %12 : vector<1x256xf32> to vector<16x256xf32>
    %55 = arith.mulf %53, %54 : vector<16x256xf32>
    %c0_42 = arith.constant 0 : index
    %c127_43 = arith.constant 127 : index
    %56 = vector.load %arg9[%c0_42, %c127_43] : memref<16x512xf32, #tpu.memory_space<vmem>>, vector<16x256xf32>
    %57 = vector.broadcast %11 : vector<1x256xf32> to vector<16x256xf32>
    %58 = arith.mulf %56, %57 : vector<16x256xf32>
    %c0_44 = arith.constant 0 : index
    %c128_45 = arith.constant 128 : index
    %59 = vector.load %arg9[%c0_44, %c128_45] : memref<16x512xf32, #tpu.memory_space<vmem>>, vector<16x256xf32>
    %c0_46 = arith.constant 0 : index
    %c129_47 = arith.constant 129 : index
    %60 = vector.load %arg9[%c0_46, %c129_47] : memref<16x512xf32, #tpu.memory_space<vmem>>, vector<16x256xf32>
    %61 = vector.broadcast %12 : vector<1x256xf32> to vector<16x256xf32>
    %62 = arith.mulf %60, %61 : vector<16x256xf32>
    %c0_48 = arith.constant 0 : index
    %c143_49 = arith.constant 143 : index
    %63 = vector.load %arg9[%c0_48, %c143_49] : memref<16x512xf32, #tpu.memory_space<vmem>>, vector<16x256xf32>
    %64 = vector.broadcast %11 : vector<1x256xf32> to vector<16x256xf32>
    %65 = arith.mulf %63, %64 : vector<16x256xf32>
    %c0_50 = arith.constant 0 : index
    %c144_51 = arith.constant 144 : index
    %66 = vector.load %arg9[%c0_50, %c144_51] : memref<16x512xf32, #tpu.memory_space<vmem>>, vector<16x256xf32>
    %c0_52 = arith.constant 0 : index
    %c145_53 = arith.constant 145 : index
    %67 = vector.load %arg9[%c0_52, %c145_53] : memref<16x512xf32, #tpu.memory_space<vmem>>, vector<16x256xf32>
    %68 = vector.broadcast %12 : vector<1x256xf32> to vector<16x256xf32>
    %69 = arith.mulf %67, %68 : vector<16x256xf32>
    %70 = tpu.concatenate %51, %52, %55, %58, %59, %62, %65, %66, %69 in 0 : vector<16x256xf32>, vector<16x256xf32>, vector<16x256xf32>, vector<16x256xf32>, vector<16x256xf32>, vector<16x256xf32>, vector<16x256xf32>, vector<16x256xf32>, vector<16x256xf32> -> vector<144x256xf32>
    %c0_54 = arith.constant 0 : index
    %c0_55 = arith.constant 0 : index
    %71 = vector.load %arg5[%c0_54, %c0_55] : memref<16x144xf32, #tpu.memory_space<vmem>>, vector<16x144xf32>
    %cst_56 = arith.constant dense<0.000000e+00> : vector<16x256xf32>
    %72 = tpu.matmul %71, %70, %cst_56 {dimension_numbers = #tpu.dot_dimension_numbers<[1], [0], [0], [1], [0, 0, 1, 1], [], []>} : vector<16x144xf32>, vector<144x256xf32>, vector<16x256xf32> -> vector<16x256xf32>
    %c0_57 = arith.constant 0 : index
    %c0_58 = arith.constant 0 : index
    %73 = vector.load %arg6[%c0_57, %c0_58] : memref<16x1xf32, #tpu.memory_space<vmem>>, vector<16x1xf32>
    %74 = vector.broadcast %73 : vector<16x1xf32> to vector<16x256xf32>
    %75 = arith.addf %72, %74 : vector<16x256xf32>
    %76 = vector.extract_strided_slice %75 {offsets = [0, 0], sizes = [10, 256], strides = [1, 1]} : vector<16x256xf32> to vector<10x256xf32>
    %cst_59 = arith.constant 0.000000e+00 : f32
    %77 = vector.broadcast %cst_59 : f32 to vector<10x256xf32>
    %78 = arith.maximumf %76, %77 : vector<10x256xf32>
    %c0_60 = arith.constant 0 : index
    %c0_61 = arith.constant 0 : index
    %c0_62 = arith.constant 0 : index
    %79 = vector.load %arg7[%c0_60, %c0_61, %c0_62] : memref<1x10x256xf32, #tpu.memory_space<vmem>>, vector<1x10x256xf32>
    %80 = vector.shape_cast %79 : vector<1x10x256xf32> to vector<10x256xf32>
    %81 = vector.shape_cast %78 : vector<10x256xf32> to vector<1x10x256xf32>
    tpu.vector_store %arg7[%c0_60, %c0_61, %c0_62], %81 {strides = array<i32>} : memref<1x10x256xf32, #tpu.memory_space<vmem>>, vector<1x10x256xf32>,
    return
  }
  func.func @transform_0(%arg0: i32) -> (i32, i32, i32) {
    %c0_i32 = arith.constant 0 : i32
    %c0_i32_0 = arith.constant 0 : i32
    %c0_i32_1 = arith.constant 0 : i32
    return %arg0, %c0_i32, %c0_i32_0 : i32, i32, i32
  }
  func.func @transform_1(%arg0: i32) -> (i32, i32) {
    %c0_i32 = arith.constant 0 : i32
    %c0_i32_0 = arith.constant 0 : i32
    %c0_i32_1 = arith.constant 0 : i32
    return %c0_i32, %c0_i32_0 : i32, i32
  }
  func.func @transform_2(%arg0: i32) -> (i32, i32) {
    %c0_i32 = arith.constant 0 : i32
    %c0_i32_0 = arith.constant 0 : i32
    %c0_i32_1 = arith.constant 0 : i32
    return %c0_i32, %c0_i32_0 : i32, i32
  }
  func.func @transform_3(%arg0: i32) -> (i32, i32) {
    %c0_i32 = arith.constant 0 : i32
    %c0_i32_0 = arith.constant 0 : i32
    %c0_i32_1 = arith.constant 0 : i32
    return %c0_i32, %c0_i32_0 : i32, i32
  }
  func.func @transform_4(%arg0: i32) -> (i32, i32) {
    %c0_i32 = arith.constant 0 : i32
    %c0_i32_0 = arith.constant 0 : i32
    %c0_i32_1 = arith.constant 0 : i32
    return %c0_i32, %c0_i32_0 : i32, i32
  }
  func.func @transform_5(%arg0: i32) -> (i32, i32) {
    %c0_i32 = arith.constant 0 : i32
    %c0_i32_0 = arith.constant 0 : i32
    %c0_i32_1 = arith.constant 0 : i32
    return %c0_i32, %c0_i32_0 : i32, i32
  }
  func.func @transform_6(%arg0: i32) -> (i32, i32, i32) {
    %c0_i32 = arith.constant 0 : i32
    %c0_i32_0 = arith.constant 0 : i32
    %c0_i32_1 = arith.constant 0 : i32
    return %arg0, %c0_i32, %c0_i32_0 : i32, i32, i32
  }
}

</mosaic_0001>

<llo_original>
// kernel: model_forward.1
$region0: #{model_forward.1}
  #allocation0 [shape = 'u32[]', space=smem, size = 0x4, offset = 0x4, fixed_abs, tag = 'smem constant byte address 0x4 - core index']
  #allocation1 [shape = 'u32[72,128]{1,0:T(1,128)}', space=vmem, size = 0x9000, scoped, tag = 'internal scratch']
  #allocation2 [shape = 'f32[8,512]{1,0:T(8,128)}', space=vmem, size = 0x4000, scoped, tag = 'scratch operand']
  #allocation3 [shape = 'f32[16,512]{1,0:T(8,128)}', space=vmem, size = 0x8000, scoped, tag = 'scratch operand']
  %s0 = inlined_call_operand.vmem [shape: f32[2,8,256], index: 0, kind: input, shape index: {}]
  %s1 = inlined_call_operand.vmem [shape: f32[2,256], index: 1, kind: input, shape index: {}]
  %s2 = inlined_call_operand.vmem [shape: f32[16,72], index: 2, kind: input, shape index: {}]
  %s3 = inlined_call_operand.vmem [shape: f32[16,1], index: 3, kind: input, shape index: {}]
  %s4 = inlined_call_operand.vmem [shape: f32[16,144], index: 4, kind: input, shape index: {}]
  %s5 = inlined_call_operand.vmem [shape: f32[16,1], index: 5, kind: input, shape index: {}]
  %s6 = inlined_call_operand.vmem [shape: f32[2,10,256], index: 6, kind: output, shape index: {}]
  %s7 = sld [smem:[#allocation0]]
  $region57: #{model_forward.1} parent=0
    _
  %s9 = ssub.s32 1, %s7
  %s10 = scalar_select 0, %s9, %s7
  loop: start=0, step=1, limit=4
  $region2: #{model_forward.1} parent=0 // loop_pre_header
    _
  $region3: #{model_forward.1} parent=0 // loop_header
    %s12 = sphi 0, %s16
    %p13 = scmp.ge.s32.totalorder %s12, 4
    %s22 = sphi 0, %s24
    %s25 = sphi 0, %s22
    %s26 = sphi 0, %s25
    %s42 = sphi 0, %s26
    %s46 = sphi 0, %s46
    %s48 = sphi 0, %s46
    %s49 = sphi 0, %s48
    %s63 = sphi 0, %s49
    %s67 = sphi 0, %s67
    %s69 = sphi 0, %s67
    %s70 = sphi 0, %s69
    %s84 = sphi 0, %s70
    %s88 = sphi 0, %s88
    %s90 = sphi 0, %s88
    %s91 = sphi 0, %s90
    %s105 = sphi 0, %s91
    %s109 = sphi 0, %s109
    %s111 = sphi 0, %s109
    %s112 = sphi 0, %s111
    %s126 = sphi 0, %s112
    %s130 = sphi 0, %s130
    %s132 = sphi 0, %s130
    %s133 = sphi 0, %s132
    %s147 = sphi 0, %s133
    %s153 = sphi 0, %s155
    %s156 = sphi 0, %s153
    %s157 = sphi 0, %s156
    %s173 = sphi 0, %s157
  $region4: #{model_forward.1} parent=0 // loop_header_branch
    %15 = sbr.rel (%p13) target = $region8
  $region5: #{model_forward.1} parent=0 // loop_body
    %s17 = ssub.s32 %s12, 1
    %s18 = ssub.s32 %s12, 2
    %s19 = sadd.s32 %s12, 1
    %s20 = ssub.s32 %s12, %s19
    %p21 = scmp.eq.s32.totalorder %s20, 0
    %s23 = sadd.s32 %s22, 1
    %s24 = scalar_select %p21, %s22, %s23
    %p27 = pneg %p21
    %p28 = scmp.eq.s32.totalorder %s12, 1
    %p29 = por %p27, %p28
    %p30 = scmp.ne.s32.totalorder %s22, %s25
    %p31 = scmp.eq.s32.totalorder %s12, 0
    %p32 = por %p30, %p31
    %p33 = scmp.ne.s32.totalorder %s22, %s25
    %p34 = scmp.eq.s32.totalorder %s17, 1
    %p35 = por %p33, %p34
    %p36 = scmp.ne.s32.totalorder %s25, %s26
    %p37 = scmp.eq.s32.totalorder %s17, 0
    %p38 = por %p36, %p37
    %p39 = scmp.ne.s32.totalorder %s25, %s26
    %p40 = scmp.eq.s32.totalorder %s18, 1
    %p41 = por %p39, %p40
    %p43 = scmp.ne.s32.totalorder %s26, %s42
    %p44 = scmp.eq.s32.totalorder %s18, 0
    %p45 = por %p43, %p44
    %s47 = sadd.s32 %s46, 1
    %p50 = scmp.eq.s32.totalorder %s12, 1
    %p51 = scmp.ne.s32.totalorder %s46, %s48
    %p52 = scmp.eq.s32.totalorder %s12, 0
    %p53 = por %p51, %p52
    %p54 = scmp.ne.s32.totalorder %s46, %s48
    %p55 = scmp.eq.s32.totalorder %s17, 1
    %p56 = por %p54, %p55
    %p57 = scmp.ne.s32.totalorder %s48, %s49
    %p58 = scmp.eq.s32.totalorder %s17, 0
    %p59 = por %p57, %p58
    %p60 = scmp.ne.s32.totalorder %s48, %s49
    %p61 = scmp.eq.s32.totalorder %s18, 1
    %p62 = por %p60, %p61
    %p64 = scmp.ne.s32.totalorder %s49, %s63
    %p65 = scmp.eq.s32.totalorder %s18, 0
    %p66 = por %p64, %p65
    %s68 = sadd.s32 %s67, 1
    %p71 = scmp.eq.s32.totalorder %s12, 1
    %p72 = scmp.ne.s32.totalorder %s67, %s69
    %p73 = scmp.eq.s32.totalorder %s12, 0
    %p74 = por %p72, %p73
    %p75 = scmp.ne.s32.totalorder %s67, %s69
    %p76 = scmp.eq.s32.totalorder %s17, 1
    %p77 = por %p75, %p76
    %p78 = scmp.ne.s32.totalorder %s69, %s70
    %p79 = scmp.eq.s32.totalorder %s17, 0
    %p80 = por %p78, %p79
    %p81 = scmp.ne.s32.totalorder %s69, %s70
    %p82 = scmp.eq.s32.totalorder %s18, 1
    %p83 = por %p81, %p82
    %p85 = scmp.ne.s32.totalorder %s70, %s84
    %p86 = scmp.eq.s32.totalorder %s18, 0
    %p87 = por %p85, %p86
    %s89 = sadd.s32 %s88, 1
    %p92 = scmp.eq.s32.totalorder %s12, 1
    %p93 = scmp.ne.s32.totalorder %s88, %s90
    %p94 = scmp.eq.s32.totalorder %s12, 0
    %p95 = por %p93, %p94
    %p96 = scmp.ne.s32.totalorder %s88, %s90
    %p97 = scmp.eq.s32.totalorder %s17, 1
    %p98 = por %p96, %p97
    %p99 = scmp.ne.s32.totalorder %s90, %s91
    %p100 = scmp.eq.s32.totalorder %s17, 0
    %p101 = por %p99, %p100
    %p102 = scmp.ne.s32.totalorder %s90, %s91
    %p103 = scmp.eq.s32.totalorder %s18, 1
    %p104 = por %p102, %p103
    %p106 = scmp.ne.s32.totalorder %s91, %s105
    %p107 = scmp.eq.s32.totalorder %s18, 0
    %p108 = por %p106, %p107
    %s110 = sadd.s32 %s109, 1
    %p113 = scmp.eq.s32.totalorder %s12, 1
    %p114 = scmp.ne.s32.totalorder %s109, %s111
    %p115 = scmp.eq.s32.totalorder %s12, 0
    %p116 = por %p114, %p115
    %p117 = scmp.ne.s32.totalorder %s109, %s111
    %p118 = scmp.eq.s32.totalorder %s17, 1
    %p119 = por %p117, %p118
    %p120 = scmp.ne.s32.totalorder %s111, %s112
    %p121 = scmp.eq.s32.totalorder %s17, 0
    %p122 = por %p120, %p121
    %p123 = scmp.ne.s32.totalorder %s111, %s112
    %p124 = scmp.eq.s32.totalorder %s18, 1
    %p125 = por %p123, %p124
    %p127 = scmp.ne.s32.totalorder %s112, %s126
    %p128 = scmp.eq.s32.totalorder %s18, 0
    %p129 = por %p127, %p128
    %s131 = sadd.s32 %s130, 1
    %p134 = scmp.eq.s32.totalorder %s12, 1
    %p135 = scmp.ne.s32.totalorder %s130, %s132
    %p136 = scmp.eq.s32.totalorder %s12, 0
    %p137 = por %p135, %p136
    %p138 = scmp.ne.s32.totalorder %s130, %s132
    %p139 = scmp.eq.s32.totalorder %s17, 1
    %p140 = por %p138, %p139
    %p141 = scmp.ne.s32.totalorder %s132, %s133
    %p142 = scmp.eq.s32.totalorder %s17, 0
    %p143 = por %p141, %p142
    %p144 = scmp.ne.s32.totalorder %s132, %s133
    %p145 = scmp.eq.s32.totalorder %s18, 1
    %p146 = por %p144, %p145
    %p148 = scmp.ne.s32.totalorder %s133, %s147
    %p149 = scmp.eq.s32.totalorder %s18, 0
    %p150 = por %p148, %p149
    %s151 = ssub.s32 %s12, %s19
    %p152 = scmp.eq.s32.totalorder %s151, 0
    %s154 = sadd.s32 %s153, 1
    %s155 = scalar_select %p152, %s153, %s154
    %p158 = pneg %p152
    %p159 = scmp.eq.s32.totalorder %s12, 1
    %p160 = por %p158, %p159
    %p161 = scmp.ne.s32.totalorder %s153, %s156
    %p162 = scmp.eq.s32.totalorder %s12, 0
    %p163 = por %p161, %p162
    %p164 = scmp.ne.s32.totalorder %s153, %s156
    %p165 = scmp.eq.s32.totalorder %s17, 1
    %p166 = por %p164, %p165
    %p167 = scmp.ne.s32.totalorder %s156, %s157
    %p168 = scmp.eq.s32.totalorder %s17, 0
    %p169 = por %p167, %p168
    %p170 = scmp.ne.s32.totalorder %s156, %s157
    %p171 = scmp.eq.s32.totalorder %s18, 1
    %p172 = por %p170, %p171
    %p174 = scmp.ne.s32.totalorder %s157, %s173
    %p175 = scmp.eq.s32.totalorder %s18, 0
    %p176 = por %p174, %p175
    %p177 = scmp.le.s32.totalorder 1, %s12
    %p178 = scmp.lt.s32.totalorder %s12, 3
    %p179 = pnand %p177, %p178
    %p180 = pneg %p179
    // Predicated region
    $region9: #{model_forward.1} parent=5 // pred_check
      _
    $region10: #{model_forward.1} parent=5 // pred_check_branch
      %182 = sbr.rel (%p179) target = $region12
    $region11: #{model_forward.1} parent=5 // pred_region
      %s183 = ssub.s32 %s12, 1
      // Predicated region
      $region13: #{model_forward.1} parent=11 // pred_check
        %p184 = pneg %p59
      $region14: #{model_forward.1} parent=11 // pred_check_branch
        %186 = sbr.rel (%p184) target = $region16
      $region15: #{model_forward.1} parent=11 // pred_region
        _
      $region16: #{model_forward.1} parent=11 // pred_fallthru
        _
      // Predicated region
      $region17: #{model_forward.1} parent=11 // pred_check
        %p187 = pneg %p80
      $region18: #{model_forward.1} parent=11 // pred_check_branch
        %189 = sbr.rel (%p187) target = $region20
      $region19: #{model_forward.1} parent=11 // pred_region
        _
      $region20: #{model_forward.1} parent=11 // pred_fallthru
        _
      // Predicated region
      $region21: #{model_forward.1} parent=11 // pred_check
        %p190 = pneg %p101
      $region22: #{model_forward.1} parent=11 // pred_check_branch
        %192 = sbr.rel (%p190) target = $region24
      $region23: #{model_forward.1} parent=11 // pred_region
        _
      $region24: #{model_forward.1} parent=11 // pred_fallthru
        _
      // Predicated region
      $region25: #{model_forward.1} parent=11 // pred_check
        %p193 = pneg %p122
      $region26: #{model_forward.1} parent=11 // pred_check_branch
        %195 = sbr.rel (%p193) target = $region28
      $region27: #{model_forward.1} parent=11 // pred_region
        _
      $region28: #{model_forward.1} parent=11 // pred_fallthru
        _
      // Predicated region
      $region29: #{model_forward.1} parent=11 // pred_check
        %p196 = pneg %p143
      $region30: #{model_forward.1} parent=11 // pred_check_branch
        %198 = sbr.rel (%p196) target = $region32
      $region31: #{model_forward.1} parent=11 // pred_region
        _
      $region32: #{model_forward.1} parent=11 // pred_fallthru
        _
    $region12: #{model_forward.1} parent=5 // pred_fallthru
      _
    %p199 = scmp.lt.s32.totalorder %s12, 2
    // Predicated region
    $region33: #{model_forward.1} parent=5 // pred_check
      %p200 = pneg %p199
    $region34: #{model_forward.1} parent=5 // pred_check_branch
      %202 = sbr.rel (%p200) target = $region36
    $region35: #{model_forward.1} parent=5 // pred_region
      // Predicated region
      $region37: #{model_forward.1} parent=35 // pred_check
        %p203 = pneg %p32
      $region38: #{model_forward.1} parent=35 // pred_check_branch
        %205 = sbr.rel (%p203) target = $region40
      $region39: #{model_forward.1} parent=35 // pred_region
        %p206 = scmp.lt.s32.totalorder %s12, 1
        %s207 = scalar_select %p206, %s12, 1
        %s208 = smul.addr %s207, 2
        %s209 = smul.addr %s208, 8
        %s210 = scalar_lea.vmem %s0, %s209
      $region40: #{model_forward.1} parent=35 // pred_fallthru
        _
    $region36: #{model_forward.1} parent=5 // pred_fallthru
      _
    %p211 = scmp.le.s32.totalorder 1, %s12
    %p212 = scmp.lt.s32.totalorder %s12, 3
    %p213 = pnand %p211, %p212
    %p214 = pneg %p213
    // Predicated region
    $region41: #{model_forward.1} parent=5 // pred_check
      _
    $region42: #{model_forward.1} parent=5 // pred_check_branch
      %216 = sbr.rel (%p213) target = $region44
    $region43: #{model_forward.1} parent=5 // pred_region
      %s217 = ssub.s32 %s12, 1
      %p218 = scmp.lt.s32.totalorder %s17, 1
      %s219 = scalar_select %p218, %s17, 1
      %s220 = smul.addr %s219, 2
      %s221 = smul.addr %s220, 8
      %s222 = scalar_lea.vmem %s0, %s221
      %p223 = pneg %p38
      %p224 = pneg %p35
      %p225 = pneg %p59
      %p226 = pneg %p56
      %p227 = pneg %p80
      %p228 = pneg %p77
      %p229 = pneg %p101
      %p230 = pneg %p98
      %p231 = pneg %p122
      %p232 = pneg %p119
      %p233 = pneg %p143
      %p234 = pneg %p140
      %p235 = pneg %p169
      %p236 = pneg %p166
      %p237 = scmp.lt.s32.totalorder %s17, 1
      %s238 = scalar_select %p237, %s17, 1
      %s239 = smul.addr %s238, 4
      %s240 = smul.addr %s239, 8
      %s241 = scalar_lea.vmem %s6, %s240
      %p242 = scmp.lt.s32.totalorder %s17, 1
      %s243 = scalar_select %p242, %s17, 1
      %s244 = smul.addr %s243, 2
      %s245 = smul.addr %s244, 8
      %s246 = scalar_lea.vmem %s0, %s245
      %p247 = scmp.lt.s32.totalorder %s17, 1
      %s248 = scalar_select %p247, %s17, 1
      %s249 = smul.addr %s248, 4
      %s250 = smul.addr %s249, 8
      %s251 = scalar_lea.vmem %s6, %s250
      %252 = vst [vmem:[#allocation2] sm:$0xff] 0.0
      %253 = vst [vmem:[#allocation2 + $0x18] sm:$0xff] 0.0
      %254 = vst [vmem:[#allocation3] sm:$0xff] 0.0
      %255 = vst [vmem:[#allocation3 + $0x20] sm:$0xff] 0.0
      %256 = vst [vmem:[#allocation3 + $0x18] sm:$0xff] 0.0
      %257 = vst [vmem:[#allocation3 + $0x38] sm:$0xff] 0.0
      %v258 = vld [vmem:[%s246] sm:$0xff]
      %v259 = vld [vmem:[%s246 + $0x8] sm:$0xff]
      %260 = vst [vmem:[#allocation2 + $0x8] sm:$0xff] %v258
      %261 = vst [vmem:[#allocation2 + $0x10] sm:$0xff] %v259
      %v262 = vld [vmem:[%s1] ss:$2 sm:$0x3]
      %s263 = scalar_lea.vmem %s1, 1
      %v264 = vld [vmem:[%s263] ss:$2 sm:$0x3]
      %v265 = vld [vmem:[#allocation2] sm:$0xff]
      %v266 = vld [vmem:[#allocation2 + $0x8] sm:$0xff]
      %v267 = vld [vmem:[#allocation2 + $0x10] sm:$0xff]
      %v269 = vperm.slane %v262, 0
      %v270 = vperm.slane %v262, 1
      %271 = vrot.lane.b32.xlu0 %v269, 111
      %v272 = vpop.permute.xlu0 %271
      %273 = vrot.lane.b32.xlu0 %v270, 111
      %v274 = vpop.permute.xlu0 %273
      %vm275 = vcmask 908288
      %v276 = vsel %vm275, %v272, %v274
      %v280 = vmul.f32 %v265, %v272
      %v281 = vmul.f32 %v266, %v276
      %v282 = vmul.f32 %v267, %v274
      %v284 = vperm.slane %v264, 0
      %v285 = vperm.slane %v264, 1
      %286 = vrot.lane.b32.xlu0 %v284, 113
      %v287 = vpop.permute.xlu0 %286
      %288 = vrot.lane.b32.xlu0 %v285, 113
      %v289 = vpop.permute.xlu0 %288
      %vm290 = vcmask 924672
      %v291 = vsel %vm290, %v287, %v289
      %v295 = vmul.f32 %v265, %v287
      %v296 = vmul.f32 %v266, %v291
      %v297 = vmul.f32 %v267, %v289
      %298 = vrot.lane.b32.xlu0 %v269, 127
      %v299 = vpop.permute.xlu0 %298
      %300 = vrot.lane.b32.xlu0 %v270, 127
      %v301 = vpop.permute.xlu0 %300
      %vm302 = vcmask 1039360
      %v303 = vsel %vm302, %v299, %v301
      %v307 = vmul.f32 %v265, %v299
      %v308 = vmul.f32 %v266, %v303
      %v309 = vmul.f32 %v267, %v301
      %v310 = vld [vmem:[#allocation2 + $0x8] sm:$0xff]
      %v311 = vld [vmem:[#allocation2 + $0x10] sm:$0xff]
      %v312 = vld [vmem:[#allocation2 + $0x18] sm:$0xff]
      %313 = vrot.lane.b32.xlu0 %v284, 1
      %v314 = vpop.permute.xlu0 %313
      %315 = vrot.lane.b32.xlu0 %v285, 1
      %v316 = vpop.permute.xlu0 %315
      %vm317 = vcmask 7168
      %v318 = vsel %vm317, %v314, %v316
      %v322 = vmul.f32 %v310, %v314
      %v323 = vmul.f32 %v311, %v318
      %v324 = vmul.f32 %v312, %v316
      %325 = vrot.lane.b32.xlu0 %v269, 15
      %v326 = vpop.permute.xlu0 %325
      %327 = vrot.lane.b32.xlu0 %v270, 15
      %v328 = vpop.permute.xlu0 %327
      %vm329 = vcmask 121856
      %v330 = vsel %vm329, %v326, %v328
      %v334 = vmul.f32 %v310, %v326
      %v335 = vmul.f32 %v311, %v330
      %v336 = vmul.f32 %v312, %v328
      %337 = vrot.lane.b32.xlu0 %v284, 17
      %v338 = vpop.permute.xlu0 %337
      %339 = vrot.lane.b32.xlu0 %v285, 17
      %v340 = vpop.permute.xlu0 %339
      %vm341 = vcmask 138240
      %v342 = vsel %vm341, %v338, %v340
      %v346 = vmul.f32 %v310, %v338
      %v347 = vmul.f32 %v311, %v342
      %v348 = vmul.f32 %v312, %v340
      %352 = vrot.lane.b32.xlu0 %v265, 127
      %v353 = vpop.permute.xlu0 %352
      %354 = vrot.lane.b32.xlu0 %v266, 127
      %v355 = vpop.permute.xlu0 %354
      %356 = vrot.lane.b32.xlu0 %v267, 127
      %v357 = vpop.permute.xlu0 %356
      %v358 = vsel %vm302, %v353, %v355
      %v359 = vsel %vm302, %v355, %v357
      %363 = vrot.lane.b32.xlu0 %v295, 126
      %v364 = vpop.permute.xlu0 %363
      %365 = vrot.lane.b32.xlu0 %v296, 126
      %v366 = vpop.permute.xlu0 %365
      %367 = vrot.lane.b32.xlu0 %v297, 126
      %v368 = vpop.permute.xlu0 %367
      %vm369 = vcmask 1031168
      %v370 = vsel %vm369, %v364, %v366
      %v371 = vsel %vm369, %v366, %v368
      %375 = vrot.lane.b32.xlu0 %v307, 112
      %v376 = vpop.permute.xlu0 %375
      %377 = vrot.lane.b32.xlu0 %v308, 112
      %v378 = vpop.permute.xlu0 %377
      %379 = vrot.lane.b32.xlu0 %v309, 112
      %v380 = vpop.permute.xlu0 %379
      %vm381 = vcmask 916480
      %v382 = vsel %vm381, %v376, %v378
      %v383 = vsel %vm381, %v378, %v380
      %384 = vrot.lane.b32.xlu0 %v266, 111
      %v385 = vpop.permute.xlu0 %384
      %386 = vrot.lane.b32.xlu0 %v267, 111
      %v387 = vpop.permute.xlu0 %386
      %v388 = vsel %vm275, %v385, %v387
      %392 = vrot.lane.b32.xlu0 %v322, 110
      %v393 = vpop.permute.xlu0 %392
      %394 = vrot.lane.b32.xlu0 %v323, 110
      %v395 = vpop.permute.xlu0 %394
      %396 = vrot.lane.b32.xlu0 %v324, 110
      %v397 = vpop.permute.xlu0 %396
      %vm398 = vcmask 900096
      %v399 = vsel %vm398, %v393, %v395
      %v400 = vsel %vm398, %v395, %v397
      %404 = vrot.lane.b32.xlu0 %v334, 96
      %v405 = vpop.permute.xlu0 %404
      %406 = vrot.lane.b32.xlu0 %v335, 96
      %v407 = vpop.permute.xlu0 %406
      %408 = vrot.lane.b32.xlu0 %v336, 96
      %v409 = vpop.permute.xlu0 %408
      %vm410 = vcmask 785408
      %v411 = vsel %vm410, %v405, %v407
      %v412 = vsel %vm410, %v407, %v409
      %416 = vrot.lane.b32.xlu0 %v310, 95
      %v417 = vpop.permute.xlu0 %416
      %418 = vrot.lane.b32.xlu0 %v311, 95
      %v419 = vpop.permute.xlu0 %418
      %420 = vrot.lane.b32.xlu0 %v312, 95
      %v421 = vpop.permute.xlu0 %420
      %vm422 = vcmask 777216
      %v423 = vsel %vm422, %v417, %v419
      %v424 = vsel %vm422, %v419, %v421
      %428 = vrot.lane.b32.xlu0 %v346, 94
      %v429 = vpop.permute.xlu0 %428
      %430 = vrot.lane.b32.xlu0 %v347, 94
      %v431 = vpop.permute.xlu0 %430
      %432 = vrot.lane.b32.xlu0 %v348, 94
      %v433 = vpop.permute.xlu0 %432
      %vm434 = vcmask 769024
      %v435 = vsel %vm434, %v429, %v431
      %v436 = vsel %vm434, %v431, %v433
      %v437 = vld [vmem:[%s2] sm:$0xff]
      %v438 = vld [vmem:[%s2 + $0x8] sm:$0xff]
      %v439 = vld [vmem:[%s3] sm:$0xff]
      %v440 = vld [vmem:[%s3 + $0x8] sm:$0xff]
      %442 = vset.pattern.permute.xlu0 0
      %443 = vperm.xlu0 %442, %v439
      %v444 = vpop.permute.xlu0 %443
      %447 = vset.pattern.permute.xlu0 0
      %448 = vperm.xlu0 %447, %v440
      %v449 = vpop.permute.xlu0 %448
      %454 = vrot.lane.b32.xlu0 %v280, 17
      %v455 = vpop.permute.xlu0 %454
      %456 = vrot.lane.b32.xlu0 %v281, 17
      %v457 = vpop.permute.xlu0 %456
      %458 = vrot.lane.b32.xlu0 %v282, 17
      %v459 = vpop.permute.xlu0 %458
      %460 = vrot.lane.b32.xlu0 %v358, 17
      %v461 = vpop.permute.xlu0 %460
      %462 = vrot.lane.b32.xlu0 %v359, 17
      %v463 = vpop.permute.xlu0 %462
      %464 = vrot.lane.b32.xlu0 %v357, 17
      %v465 = vpop.permute.xlu0 %464
      %466 = vrot.lane.b32.xlu0 %v370, 17
      %v467 = vpop.permute.xlu0 %466
      %468 = vrot.lane.b32.xlu0 %v371, 17
      %v469 = vpop.permute.xlu0 %468
      %470 = vrot.lane.b32.xlu0 %v368, 17
      %v471 = vpop.permute.xlu0 %470
      %472 = vrot.lane.b32.xlu0 %v382, 17
      %v473 = vpop.permute.xlu0 %472
      %474 = vrot.lane.b32.xlu0 %v383, 17
      %v475 = vpop.permute.xlu0 %474
      %476 = vrot.lane.b32.xlu0 %v380, 17
      %v477 = vpop.permute.xlu0 %476
      %478 = vrot.lane.b32.xlu0 %v385, 17
      %v479 = vpop.permute.xlu0 %478
      %480 = vrot.lane.b32.xlu0 %v388, 17
      %v481 = vpop.permute.xlu0 %480
      %482 = vrot.lane.b32.xlu0 %v387, 17
      %v483 = vpop.permute.xlu0 %482
      %484 = vrot.lane.b32.xlu0 %v393, 17
      %v485 = vpop.permute.xlu0 %484
      %486 = vrot.lane.b32.xlu0 %v399, 17
      %v487 = vpop.permute.xlu0 %486
      %488 = vrot.lane.b32.xlu0 %v400, 17
      %v489 = vpop.permute.xlu0 %488
      %490 = vrot.lane.b32.xlu0 %v405, 17
      %v491 = vpop.permute.xlu0 %490
      %492 = vrot.lane.b32.xlu0 %v411, 17
      %v493 = vpop.permute.xlu0 %492
      %494 = vrot.lane.b32.xlu0 %v412, 17
      %v495 = vpop.permute.xlu0 %494
      %496 = vrot.lane.b32.xlu0 %v417, 17
      %v497 = vpop.permute.xlu0 %496
      %498 = vrot.lane.b32.xlu0 %v423, 17
      %v499 = vpop.permute.xlu0 %498
      %500 = vrot.lane.b32.xlu0 %v424, 17
      %v501 = vpop.permute.xlu0 %500
      %502 = vrot.lane.b32.xlu0 %v429, 17
      %v503 = vpop.permute.xlu0 %502
      %504 = vrot.lane.b32.xlu0 %v435, 17
      %v505 = vpop.permute.xlu0 %504
      %506 = vrot.lane.b32.xlu0 %v436, 17
      %v507 = vpop.permute.xlu0 %506
      %v508 = vsel %vm341, %v455, %v457
      %v509 = vsel %vm341, %v457, %v459
      %v510 = vsel %vm341, %v461, %v463
      %v511 = vsel %vm341, %v463, %v465
      %v512 = vsel %vm341, %v467, %v469
      %v513 = vsel %vm341, %v469, %v471
      %v514 = vsel %vm341, %v473, %v475
      %v515 = vsel %vm341, %v475, %v477
      %v516 = vsel %vm341, %v479, %v481
      %v517 = vsel %vm341, %v481, %v483
      %v518 = vsel %vm341, %v485, %v487
      %v519 = vsel %vm341, %v487, %v489
      %v520 = vsel %vm341, %v491, %v493
      %v521 = vsel %vm341, %v493, %v495
      %v522 = vsel %vm341, %v497, %v499
      %v523 = vsel %vm341, %v499, %v501
      %v524 = vsel %vm341, %v503, %v505
      %v525 = vsel %vm341, %v505, %v507
      %vm544 = vcmask 588800
      %v546 = vsel %vm544, %v437, 0
      %v549 = vsel %vm544, %v438, 0
      %551 = vmatpush.msra.mxu0 0.0
      %552 = vmatpush.msra.mxu0 0.0
      %553 = vmatpush.msra.mxu0 0.0
      %554 = vmatpush.msra.mxu0 0.0
      %555 = vmatpush.msra.mxu0 0.0
      %556 = vmatpush.msra.mxu0 0.0
      %557 = vmatpush.msra.mxu0 0.0
      %558 = vmatpush.msra.mxu0 %v524
      %559 = vmatpush.msra.mxu0 %v522
      %560 = vmatpush.msra.mxu0 %v520
      %561 = vmatpush.msra.mxu0 %v518
      %562 = vmatpush.msra.mxu0 %v516
      %563 = vmatpush.msra.mxu0 %v514
      %564 = vmatpush.msra.mxu0 %v512
      %565 = vmatpush.msra.mxu0 %v510
      %566 = vmatpush.msra.mxu0 %v508
      %567 = vmatmul.f32.gmra.mxu0 %v546
      %v568 = vpop.f32.mrf.mxu0
      %v569 = vadd.f32 %v444, %v568
      %570 = vmatmul.f32.gmra.mxu0 %v549
      %v571 = vpop.f32.mrf.mxu0
      %v572 = vadd.f32 %v449, %v571
      %573 = vdwg.mxu0
      %574 = vmatpush.msra.mxu0 0.0
      %575 = vmatpush.msra.mxu0 0.0
      %576 = vmatpush.msra.mxu0 0.0
      %577 = vmatpush.msra.mxu0 0.0
      %578 = vmatpush.msra.mxu0 0.0
      %579 = vmatpush.msra.mxu0 0.0
      %580 = vmatpush.msra.mxu0 0.0
      %581 = vmatpush.msra.mxu0 %v525
      %582 = vmatpush.msra.mxu0 %v523
      %583 = vmatpush.msra.mxu0 %v521
      %584 = vmatpush.msra.mxu0 %v519
      %585 = vmatpush.msra.mxu0 %v517
      %586 = vmatpush.msra.mxu0 %v515
      %587 = vmatpush.msra.mxu0 %v513
      %588 = vmatpush.msra.mxu0 %v511
      %589 = vmatpush.msra.mxu0 %v509
      %590 = vmatmul.f32.gmra.mxu0 %v546
      %v591 = vpop.f32.mrf.mxu0
      %v592 = vadd.f32 %v444, %v591
      %593 = vmatmul.f32.gmra.mxu0 %v549
      %v594 = vpop.f32.mrf.mxu0
      %v595 = vadd.f32 %v449, %v594
      %596 = vdwg.mxu0
      %vm597 = vcmp.gt.f32.partialorder %v569, 0.0
      %vm598 = vcmp.gt.f32.partialorder %v592, 0.0
      %vm599 = vcmp.gt.f32.partialorder %v572, 0.0
      %vm600 = vcmp.gt.f32.partialorder %v595, 0.0
      %v601 = vmin.f32 %v569, 0.0
      %v602 = vmin.f32 %v592, 0.0
      %v603 = vmin.f32 %v572, 0.0
      %v604 = vmin.f32 %v595, 0.0
      %v605 = vmul.f32 %v601, 1.442695
      %v606 = vpow.pop %v605
      %v607 = vmul.f32 %v602, 1.442695
      %v608 = vpow.pop %v607
      %v609 = vmul.f32 %v603, 1.442695
      %v610 = vpow.pop %v609
      %v611 = vmul.f32 %v604, 1.442695
      %v612 = vpow.pop %v611
      %v613 = vsub.f32 %v606, 1.0
      %v614 = vsub.f32 %v608, 1.0
      %v615 = vsub.f32 %v610, 1.0
      %v616 = vsub.f32 %v612, 1.0
      %v617 = vsel %vm597, %v569, %v613
      %v618 = vsel %vm598, %v592, %v614
      %v619 = vsel %vm599, %v572, %v615
      %v620 = vsel %vm600, %v595, %v616
      %621 = vst [vmem:[#allocation3 + $0x8] sm:$0xff] %v617
      %622 = vst [vmem:[#allocation3 + $0x10] sm:$0xff] %v618
      %623 = vst [vmem:[#allocation3 + $0x28] sm:$0xff] %v619
      %624 = vst [vmem:[#allocation3 + $0x30] sm:$0xff] %v620
      %v625 = vld [vmem:[#allocation3] sm:$0xff]
      %v626 = vld [vmem:[#allocation3 + $0x8] sm:$0xff]
      %v627 = vld [vmem:[#allocation3 + $0x10] sm:$0xff]
      %v628 = vld [vmem:[#allocation3 + $0x20] sm:$0xff]
      %v629 = vld [vmem:[#allocation3 + $0x28] sm:$0xff]
      %v630 = vld [vmem:[#allocation3 + $0x30] sm:$0xff]
      %v631 = vmul.f32 %v625, %v272
      %v632 = vmul.f32 %v626, %v276
      %v633 = vmul.f32 %v627, %v274
      %v634 = vmul.f32 %v628, %v272
      %v635 = vmul.f32 %v629, %v276
      %v636 = vmul.f32 %v630, %v274
      %v637 = vmul.f32 %v625, %v287
      %v638 = vmul.f32 %v626, %v291
      %v639 = vmul.f32 %v627, %v289
      %v640 = vmul.f32 %v628, %v287
      %v641 = vmul.f32 %v629, %v291
      %v642 = vmul.f32 %v630, %v289
      %v643 = vmul.f32 %v625, %v299
      %v644 = vmul.f32 %v626, %v303
      %v645 = vmul.f32 %v627, %v301
      %v646 = vmul.f32 %v628, %v299
      %v647 = vmul.f32 %v629, %v303
      %v648 = vmul.f32 %v630, %v301
      %v649 = vld [vmem:[#allocation3 + $0x8] sm:$0xff]
      %v650 = vld [vmem:[#allocation3 + $0x10] sm:$0xff]
      %v651 = vld [vmem:[#allocation3 + $0x18] sm:$0xff]
      %v652 = vld [vmem:[#allocation3 + $0x28] sm:$0xff]
      %v653 = vld [vmem:[#allocation3 + $0x30] sm:$0xff]
      %v654 = vld [vmem:[#allocation3 + $0x38] sm:$0xff]
      %v655 = vmul.f32 %v649, %v314
      %v656 = vmul.f32 %v650, %v318
      %v657 = vmul.f32 %v651, %v316
      %v658 = vmul.f32 %v652, %v314
      %v659 = vmul.f32 %v653, %v318
      %v660 = vmul.f32 %v654, %v316
      %v661 = vmul.f32 %v649, %v326
      %v662 = vmul.f32 %v650, %v330
      %v663 = vmul.f32 %v651, %v328
      %v664 = vmul.f32 %v652, %v326
      %v665 = vmul.f32 %v653, %v330
      %v666 = vmul.f32 %v654, %v328
      %v667 = vmul.f32 %v649, %v338
      %v668 = vmul.f32 %v650, %v342
      %v669 = vmul.f32 %v651, %v340
      %v670 = vmul.f32 %v652, %v338
      %v671 = vmul.f32 %v653, %v342
      %v672 = vmul.f32 %v654, %v340
      %679 = vrot.lane.b32.xlu0 %v625, 127
      %v680 = vpop.permute.xlu0 %679
      %681 = vrot.lane.b32.xlu0 %v626, 127
      %v682 = vpop.permute.xlu0 %681
      %683 = vrot.lane.b32.xlu0 %v627, 127
      %v684 = vpop.permute.xlu0 %683
      %685 = vrot.lane.b32.xlu0 %v628, 127
      %v686 = vpop.permute.xlu0 %685
      %687 = vrot.lane.b32.xlu0 %v629, 127
      %v688 = vpop.permute.xlu0 %687
      %689 = vrot.lane.b32.xlu0 %v630, 127
      %v690 = vpop.permute.xlu0 %689
      %v691 = vsel %vm302, %v680, %v682
      %v692 = vsel %vm302, %v682, %v684
      %v693 = vsel %vm302, %v686, %v688
      %v694 = vsel %vm302, %v688, %v690
      %701 = vrot.lane.b32.xlu0 %v637, 126
      %v702 = vpop.permute.xlu0 %701
      %703 = vrot.lane.b32.xlu0 %v638, 126
      %v704 = vpop.permute.xlu0 %703
      %705 = vrot.lane.b32.xlu0 %v639, 126
      %v706 = vpop.permute.xlu0 %705
      %707 = vrot.lane.b32.xlu0 %v640, 126
      %v708 = vpop.permute.xlu0 %707
      %709 = vrot.lane.b32.xlu0 %v641, 126
      %v710 = vpop.permute.xlu0 %709
      %711 = vrot.lane.b32.xlu0 %v642, 126
      %v712 = vpop.permute.xlu0 %711
      %v713 = vsel %vm369, %v702, %v704
      %v714 = vsel %vm369, %v704, %v706
      %v715 = vsel %vm369, %v708, %v710
      %v716 = vsel %vm369, %v710, %v712
      %723 = vrot.lane.b32.xlu0 %v643, 112
      %v724 = vpop.permute.xlu0 %723
      %725 = vrot.lane.b32.xlu0 %v644, 112
      %v726 = vpop.permute.xlu0 %725
      %727 = vrot.lane.b32.xlu0 %v645, 112
      %v728 = vpop.permute.xlu0 %727
      %729 = vrot.lane.b32.xlu0 %v646, 112
      %v730 = vpop.permute.xlu0 %729
      %731 = vrot.lane.b32.xlu0 %v647, 112
      %v732 = vpop.permute.xlu0 %731
      %733 = vrot.lane.b32.xlu0 %v648, 112
      %v734 = vpop.permute.xlu0 %733
      %v735 = vsel %vm381, %v724, %v726
      %v736 = vsel %vm381, %v726, %v728
      %v737 = vsel %vm381, %v730, %v732
      %v738 = vsel %vm381, %v732, %v734
      %739 = vrot.lane.b32.xlu0 %v626, 111
      %v740 = vpop.permute.xlu0 %739
      %741 = vrot.lane.b32.xlu0 %v627, 111
      %v742 = vpop.permute.xlu0 %741
      %743 = vrot.lane.b32.xlu0 %v629, 111
      %v744 = vpop.permute.xlu0 %743
      %745 = vrot.lane.b32.xlu0 %v630, 111
      %v746 = vpop.permute.xlu0 %745
      %v747 = vsel %vm275, %v740, %v742
      %v748 = vsel %vm275, %v744, %v746
      %755 = vrot.lane.b32.xlu0 %v655, 110
      %v756 = vpop.permute.xlu0 %755
      %757 = vrot.lane.b32.xlu0 %v656, 110
      %v758 = vpop.permute.xlu0 %757
      %759 = vrot.lane.b32.xlu0 %v657, 110
      %v760 = vpop.permute.xlu0 %759
      %761 = vrot.lane.b32.xlu0 %v658, 110
      %v762 = vpop.permute.xlu0 %761
      %763 = vrot.lane.b32.xlu0 %v659, 110
      %v764 = vpop.permute.xlu0 %763
      %765 = vrot.lane.b32.xlu0 %v660, 110
      %v766 = vpop.permute.xlu0 %765
      %v767 = vsel %vm398, %v756, %v758
      %v768 = vsel %vm398, %v758, %v760
      %v769 = vsel %vm398, %v762, %v764
      %v770 = vsel %vm398, %v764, %v766
      %777 = vrot.lane.b32.xlu0 %v661, 96
      %v778 = vpop.permute.xlu0 %777
      %779 = vrot.lane.b32.xlu0 %v662, 96
      %v780 = vpop.permute.xlu0 %779
      %781 = vrot.lane.b32.xlu0 %v663, 96
      %v782 = vpop.permute.xlu0 %781
      %783 = vrot.lane.b32.xlu0 %v664, 96
      %v784 = vpop.permute.xlu0 %783
      %785 = vrot.lane.b32.xlu0 %v665, 96
      %v786 = vpop.permute.xlu0 %785
      %787 = vrot.lane.b32.xlu0 %v666, 96
      %v788 = vpop.permute.xlu0 %787
      %v789 = vsel %vm410, %v778, %v780
      %v790 = vsel %vm410, %v780, %v782
      %v791 = vsel %vm410, %v784, %v786
      %v792 = vsel %vm410, %v786, %v788
      %799 = vrot.lane.b32.xlu0 %v649, 95
      %v800 = vpop.permute.xlu0 %799
      %801 = vrot.lane.b32.xlu0 %v650, 95
      %v802 = vpop.permute.xlu0 %801
      %803 = vrot.lane.b32.xlu0 %v651, 95
      %v804 = vpop.permute.xlu0 %803
      %805 = vrot.lane.b32.xlu0 %v652, 95
      %v806 = vpop.permute.xlu0 %805
      %807 = vrot.lane.b32.xlu0 %v653, 95
      %v808 = vpop.permute.xlu0 %807
      %809 = vrot.lane.b32.xlu0 %v654, 95
      %v810 = vpop.permute.xlu0 %809
      %v811 = vsel %vm422, %v800, %v802
      %v812 = vsel %vm422, %v802, %v804
      %v813 = vsel %vm422, %v806, %v808
      %v814 = vsel %vm422, %v808, %v810
      %821 = vrot.lane.b32.xlu0 %v667, 94
      %v822 = vpop.permute.xlu0 %821
      %823 = vrot.lane.b32.xlu0 %v668, 94
      %v824 = vpop.permute.xlu0 %823
      %825 = vrot.lane.b32.xlu0 %v669, 94
      %v826 = vpop.permute.xlu0 %825
      %827 = vrot.lane.b32.xlu0 %v670, 94
      %v828 = vpop.permute.xlu0 %827
      %829 = vrot.lane.b32.xlu0 %v671, 94
      %v830 = vpop.permute.xlu0 %829
      %831 = vrot.lane.b32.xlu0 %v672, 94
      %v832 = vpop.permute.xlu0 %831
      %v833 = vsel %vm434, %v822, %v824
      %v834 = vsel %vm434, %v824, %v826
      %v835 = vsel %vm434, %v828, %v830
      %v836 = vsel %vm434, %v830, %v832
      %v837 = vld [vmem:[%s4] sm:$0xff]
      %v838 = vld [vmem:[%s4 + $0x8] sm:$0xff]
      %v839 = vld [vmem:[%s4 + $0x10] sm:$0xff]
      %v840 = vld [vmem:[%s4 + $0x18] sm:$0xff]
      %v841 = vld [vmem:[%s5] sm:$0xff]
      %v842 = vld [vmem:[%s5 + $0x8] sm:$0xff]
      %844 = vset.pattern.permute.xlu0 0
      %845 = vperm.xlu0 %844, %v841
      %v846 = vpop.permute.xlu0 %845
      %849 = vset.pattern.permute.xlu0 0
      %850 = vperm.xlu0 %849, %v842
      %v851 = vpop.permute.xlu0 %850
      %859 = vrot.lane.b32.xlu0 %v631, 17
      %v860 = vpop.permute.xlu0 %859
      %861 = vrot.lane.b32.xlu0 %v632, 17
      %v862 = vpop.permute.xlu0 %861
      %863 = vrot.lane.b32.xlu0 %v633, 17
      %v864 = vpop.permute.xlu0 %863
      %865 = vrot.lane.b32.xlu0 %v634, 17
      %v866 = vpop.permute.xlu0 %865
      %867 = vrot.lane.b32.xlu0 %v635, 17
      %v868 = vpop.permute.xlu0 %867
      %869 = vrot.lane.b32.xlu0 %v636, 17
      %v870 = vpop.permute.xlu0 %869
      %871 = vrot.lane.b32.xlu0 %v691, 17
      %v872 = vpop.permute.xlu0 %871
      %873 = vrot.lane.b32.xlu0 %v692, 17
      %v874 = vpop.permute.xlu0 %873
      %875 = vrot.lane.b32.xlu0 %v684, 17
      %v876 = vpop.permute.xlu0 %875
      %877 = vrot.lane.b32.xlu0 %v693, 17
      %v878 = vpop.permute.xlu0 %877
      %879 = vrot.lane.b32.xlu0 %v694, 17
      %v880 = vpop.permute.xlu0 %879
      %881 = vrot.lane.b32.xlu0 %v690, 17
      %v882 = vpop.permute.xlu0 %881
      %883 = vrot.lane.b32.xlu0 %v713, 17
      %v884 = vpop.permute.xlu0 %883
      %885 = vrot.lane.b32.xlu0 %v714, 17
      %v886 = vpop.permute.xlu0 %885
      %887 = vrot.lane.b32.xlu0 %v706, 17
      %v888 = vpop.permute.xlu0 %887
      %889 = vrot.lane.b32.xlu0 %v715, 17
      %v890 = vpop.permute.xlu0 %889
      %891 = vrot.lane.b32.xlu0 %v716, 17
      %v892 = vpop.permute.xlu0 %891
      %893 = vrot.lane.b32.xlu0 %v712, 17
      %v894 = vpop.permute.xlu0 %893
      %895 = vrot.lane.b32.xlu0 %v735, 17
      %v896 = vpop.permute.xlu0 %895
      %897 = vrot.lane.b32.xlu0 %v736, 17
      %v898 = vpop.permute.xlu0 %897
      %899 = vrot.lane.b32.xlu0 %v728, 17
      %v900 = vpop.permute.xlu0 %899
      %901 = vrot.lane.b32.xlu0 %v737, 17
      %v902 = vpop.permute.xlu0 %901
      %903 = vrot.lane.b32.xlu0 %v738, 17
      %v904 = vpop.permute.xlu0 %903
      %905 = vrot.lane.b32.xlu0 %v734, 17
      %v906 = vpop.permute.xlu0 %905
      %907 = vrot.lane.b32.xlu0 %v740, 17
      %v908 = vpop.permute.xlu0 %907
      %909 = vrot.lane.b32.xlu0 %v747, 17
      %v910 = vpop.permute.xlu0 %909
      %911 = vrot.lane.b32.xlu0 %v742, 17
      %v912 = vpop.permute.xlu0 %911
      %913 = vrot.lane.b32.xlu0 %v744, 17
      %v914 = vpop.permute.xlu0 %913
      %915 = vrot.lane.b32.xlu0 %v748, 17
      %v916 = vpop.permute.xlu0 %915
      %917 = vrot.lane.b32.xlu0 %v746, 17
      %v918 = vpop.permute.xlu0 %917
      %919 = vrot.lane.b32.xlu0 %v756, 17
      %v920 = vpop.permute.xlu0 %919
      %921 = vrot.lane.b32.xlu0 %v767, 17
      %v922 = vpop.permute.xlu0 %921
      %923 = vrot.lane.b32.xlu0 %v768, 17
      %v924 = vpop.permute.xlu0 %923
      %925 = vrot.lane.b32.xlu0 %v762, 17
      %v926 = vpop.permute.xlu0 %925
      %927 = vrot.lane.b32.xlu0 %v769, 17
      %v928 = vpop.permute.xlu0 %927
      %929 = vrot.lane.b32.xlu0 %v770, 17
      %v930 = vpop.permute.xlu0 %929
      %931 = vrot.lane.b32.xlu0 %v778, 17
      %v932 = vpop.permute.xlu0 %931
      %933 = vrot.lane.b32.xlu0 %v789, 17
      %v934 = vpop.permute.xlu0 %933
      %935 = vrot.lane.b32.xlu0 %v790, 17
      %v936 = vpop.permute.xlu0 %935
      %937 = vrot.lane.b32.xlu0 %v784, 17
      %v938 = vpop.permute.xlu0 %937
      %939 = vrot.lane.b32.xlu0 %v791, 17
      %v940 = vpop.permute.xlu0 %939
      %941 = vrot.lane.b32.xlu0 %v792, 17
      %v942 = vpop.permute.xlu0 %941
      %943 = vrot.lane.b32.xlu0 %v800, 17
      %v944 = vpop.permute.xlu0 %943
      %945 = vrot.lane.b32.xlu0 %v811, 17
      %v946 = vpop.permute.xlu0 %945
      %947 = vrot.lane.b32.xlu0 %v812, 17
      %v948 = vpop.permute.xlu0 %947
      %949 = vrot.lane.b32.xlu0 %v806, 17
      %v950 = vpop.permute.xlu0 %949
      %951 = vrot.lane.b32.xlu0 %v813, 17
      %v952 = vpop.permute.xlu0 %951
      %953 = vrot.lane.b32.xlu0 %v814, 17
      %v954 = vpop.permute.xlu0 %953
      %955 = vrot.lane.b32.xlu0 %v822, 17
      %v956 = vpop.permute.xlu0 %955
      %957 = vrot.lane.b32.xlu0 %v833, 17
      %v958 = vpop.permute.xlu0 %957
      %959 = vrot.lane.b32.xlu0 %v834, 17
      %v960 = vpop.permute.xlu0 %959
      %961 = vrot.lane.b32.xlu0 %v828, 17
      %v962 = vpop.permute.xlu0 %961
      %963 = vrot.lane.b32.xlu0 %v835, 17
      %v964 = vpop.permute.xlu0 %963
      %965 = vrot.lane.b32.xlu0 %v836, 17
      %v966 = vpop.permute.xlu0 %965
      %v967 = vsel %vm341, %v860, %v862
      %v968 = vsel %vm341, %v862, %v864
      %v969 = vsel %vm341, %v866, %v868
      %v970 = vsel %vm341, %v868, %v870
      %v971 = vsel %vm341, %v872, %v874
      %v972 = vsel %vm341, %v874, %v876
      %v973 = vsel %vm341, %v878, %v880
      %v974 = vsel %vm341, %v880, %v882
      %v975 = vsel %vm341, %v884, %v886
      %v976 = vsel %vm341, %v886, %v888
      %v977 = vsel %vm341, %v890, %v892
      %v978 = vsel %vm341, %v892, %v894
      %v979 = vsel %vm341, %v896, %v898
      %v980 = vsel %vm341, %v898, %v900
      %v981 = vsel %vm341, %v902, %v904
      %v982 = vsel %vm341, %v904, %v906
      %v983 = vsel %vm341, %v908, %v910
      %v984 = vsel %vm341, %v910, %v912
      %v985 = vsel %vm341, %v914, %v916
      %v986 = vsel %vm341, %v916, %v918
      %v987 = vsel %vm341, %v920, %v922
      %v988 = vsel %vm341, %v922, %v924
      %v989 = vsel %vm341, %v926, %v928
      %v990 = vsel %vm341, %v928, %v930
      %v991 = vsel %vm341, %v932, %v934
      %v992 = vsel %vm341, %v934, %v936
      %v993 = vsel %vm341, %v938, %v940
      %v994 = vsel %vm341, %v940, %v942
      %v995 = vsel %vm341, %v944, %v946
      %v996 = vsel %vm341, %v946, %v948
      %v997 = vsel %vm341, %v950, %v952
      %v998 = vsel %vm341, %v952, %v954
      %v999 = vsel %vm341, %v956, %v958
      %v1000 = vsel %vm341, %v958, %v960
      %v1001 = vsel %vm341, %v962, %v964
      %v1002 = vsel %vm341, %v964, %v966
      %vm1039 = vcmask 130048
      %v1041 = vsel %vm1039, %v838, 0
      %v1044 = vsel %vm1039, %v840, 0
      %1046 = vmatpush.msra.mxu0 %v997
      %1047 = vmatpush.msra.mxu0 %v995
      %1048 = vmatpush.msra.mxu0 %v993
      %1049 = vmatpush.msra.mxu0 %v991
      %1050 = vmatpush.msra.mxu0 %v989
      %1051 = vmatpush.msra.mxu0 %v987
      %1052 = vmatpush.msra.mxu0 %v985
      %1053 = vmatpush.msra.mxu0 %v983
      %1054 = vmatpush.msra.mxu0 %v981
      %1055 = vmatpush.msra.mxu0 %v979
      %1056 = vmatpush.msra.mxu0 %v977
      %1057 = vmatpush.msra.mxu0 %v975
      %1058 = vmatpush.msra.mxu0 %v973
      %1059 = vmatpush.msra.mxu0 %v971
      %1060 = vmatpush.msra.mxu0 %v969
      %1061 = vmatpush.msra.mxu0 %v967
      %1062 = vmatmul.f32.gmra.mxu0 %v837
      %v1063 = vpop.f32.mrf.mxu0
      %v1064 = vadd.f32 %v846, %v1063
      %1065 = vmatmul.f32.gmra.mxu0 %v839
      %v1066 = vpop.f32.mrf.mxu0
      %v1067 = vadd.f32 %v851, %v1066
      %1068 = vdwg.mxu0
      %1069 = vmatpush.msra.mxu0 0.0
      %1070 = vmatpush.msra.mxu0 0.0
      %1071 = vmatpush.msra.mxu0 0.0
      %1072 = vmatpush.msra.mxu0 0.0
      %1073 = vmatpush.msra.mxu0 0.0
      %1074 = vmatpush.msra.mxu0 0.0
      %1075 = vmatpush.msra.mxu0 0.0
      %1076 = vmatpush.msra.mxu0 0.0
      %1077 = vmatpush.msra.mxu0 0.0
      %1078 = vmatpush.msra.mxu0 0.0
      %1079 = vmatpush.msra.mxu0 0.0
      %1080 = vmatpush.msra.mxu0 0.0
      %1081 = vmatpush.msra.mxu0 0.0
      %1082 = vmatpush.msra.mxu0 0.0
      %1083 = vmatpush.msra.mxu0 %v1001
      %1084 = vmatpush.msra.mxu0 %v999
      %1085 = vmatmul.f32.gmra.mxu0 %v1041
      %v1086 = vpop.f32.mrf.mxu0
      %v1087 = vadd.f32 %v1064, %v1086
      %1088 = vmatmul.f32.gmra.mxu0 %v1044
      %v1089 = vpop.f32.mrf.mxu0
      %v1090 = vadd.f32 %v1067, %v1089
      %1091 = vdwg.mxu0
      %1092 = vmatpush.msra.mxu0 %v998
      %1093 = vmatpush.msra.mxu0 %v996
      %1094 = vmatpush.msra.mxu0 %v994
      %1095 = vmatpush.msra.mxu0 %v992
      %1096 = vmatpush.msra.mxu0 %v990
      %1097 = vmatpush.msra.mxu0 %v988
      %1098 = vmatpush.msra.mxu0 %v986
      %1099 = vmatpush.msra.mxu0 %v984
      %1100 = vmatpush.msra.mxu0 %v982
      %1101 = vmatpush.msra.mxu0 %v980
      %1102 = vmatpush.msra.mxu0 %v978
      %1103 = vmatpush.msra.mxu0 %v976
      %1104 = vmatpush.msra.mxu0 %v974
      %1105 = vmatpush.msra.mxu0 %v972
      %1106 = vmatpush.msra.mxu0 %v970
      %1107 = vmatpush.msra.mxu0 %v968
      %1108 = vmatmul.f32.gmra.mxu0 %v837
      %v1109 = vpop.f32.mrf.mxu0
      %v1110 = vadd.f32 %v846, %v1109
      %1111 = vmatmul.f32.gmra.mxu0 %v839
      %v1112 = vpop.f32.mrf.mxu0
      %v1113 = vadd.f32 %v851, %v1112
      %1114 = vdwg.mxu0
      %1115 = vmatpush.msra.mxu0 0.0
      %1116 = vmatpush.msra.mxu0 0.0
      %1117 = vmatpush.msra.mxu0 0.0
      %1118 = vmatpush.msra.mxu0 0.0
      %1119 = vmatpush.msra.mxu0 0.0
      %1120 = vmatpush.msra.mxu0 0.0
      %1121 = vmatpush.msra.mxu0 0.0
      %1122 = vmatpush.msra.mxu0 0.0
      %1123 = vmatpush.msra.mxu0 0.0
      %1124 = vmatpush.msra.mxu0 0.0
      %1125 = vmatpush.msra.mxu0 0.0
      %1126 = vmatpush.msra.mxu0 0.0
      %1127 = vmatpush.msra.mxu0 0.0
      %1128 = vmatpush.msra.mxu0 0.0
      %1129 = vmatpush.msra.mxu0 %v1002
      %1130 = vmatpush.msra.mxu0 %v1000
      %1131 = vmatmul.f32.gmra.mxu0 %v1041
      %v1132 = vpop.f32.mrf.mxu0
      %v1133 = vadd.f32 %v1110, %v1132
      %1134 = vmatmul.f32.gmra.mxu0 %v1044
      %v1135 = vpop.f32.mrf.mxu0
      %v1136 = vadd.f32 %v1113, %v1135
      %1137 = vdwg.mxu0
      %v1138 = vmax.f32 %v1087, 0.0
      %v1139 = vmax.f32 %v1133, 0.0
      %v1140 = vmax.f32 %v1090, 0.0
      %v1141 = vmax.f32 %v1136, 0.0
      %1142 = vst [vmem:[%s251] sm:$0xff] %v1138
      %1143 = vst [vmem:[%s251 + $0x8] sm:$0xff] %v1139
      %1144 = vst [vmem:[%s251 + $0x10] sm:$0x3] %v1140
      %1145 = vst [vmem:[%s251 + $0x18] sm:$0x3] %v1141
      %p1146 = scmp.lt.s32.totalorder %s17, 1
      %s1147 = scalar_select %p1146, %s17, 1
      %s1148 = smul.addr %s1147, 4
      %s1149 = smul.addr %s1148, 8
      %s1150 = scalar_lea.vmem %s6, %s1149
      // Predicated region
      $region45: #{model_forward.1} parent=43 // pred_check
        %p1151 = pneg %p166
      $region46: #{model_forward.1} parent=43 // pred_check_branch
        %1153 = sbr.rel (%p1151) target = $region48
      $region47: #{model_forward.1} parent=43 // pred_region
        _
      $region48: #{model_forward.1} parent=43 // pred_fallthru
        _
    $region44: #{model_forward.1} parent=5 // pred_fallthru
      _
    %p1154 = scmp.le.s32.totalorder 2, %s12
    // Predicated region
    $region49: #{model_forward.1} parent=5 // pred_check
      %p1155 = pneg %p1154
    $region50: #{model_forward.1} parent=5 // pred_check_branch
      %1157 = sbr.rel (%p1155) target = $region52
    $region51: #{model_forward.1} parent=5 // pred_region
      %s1158 = ssub.s32 %s12, 2
      // Predicated region
      $region53: #{model_forward.1} parent=51 // pred_check
        %p1159 = pneg %p172
      $region54: #{model_forward.1} parent=51 // pred_check_branch
        %1161 = sbr.rel (%p1159) target = $region56
      $region55: #{model_forward.1} parent=51 // pred_region
        %p1162 = scmp.lt.s32.totalorder %s18, 1
        %s1163 = scalar_select %p1162, %s18, 1
        %s1164 = smul.addr %s1163, 4
        %s1165 = smul.addr %s1164, 8
        %s1166 = scalar_lea.vmem %s6, %s1165
      $region56: #{model_forward.1} parent=51 // pred_fallthru
        _
    $region52: #{model_forward.1} parent=5 // pred_fallthru
      _
  $region6: #{model_forward.1} parent=0 // loop_footer
    %s16 = sadd.s32 1, %s12
  $region7: #{model_forward.1} parent=0 // loop_footer_branch
    %11 = sbr.rel target = $region3
  $region8: #{model_forward.1} parent=0 // loop_exit
    _

</llo_original>
